<compile_context>
chip_gen: v5e
topology: v5e:2x2
jax: 0.10.0
libtpu: 0.0.40
codegen_flags: <defaults>
</compile_context>

<pallas_src>
import jax
import jax.numpy as jnp
from jax.experimental import pallas as pl
from jax.experimental.pallas import tpu as pltpu


# ------------------------- fused embedding + LSTM stack -------------------------

def _make_lstm_stack_kernel(B, E, H, Din):
    """Kernel closure over static dims.

    carry_ref (VMEM scratch, persists across grid steps), shape (B, Din + H):
        [:, :Din]  -> current layer input x (zero-padded to Din)
        [:, Din:]  -> this layer's previous hidden state h
    """

    def kernel(ids_ref,              # SMEM (B,) int32   (scalar prefetch)
               emb_hbm,              # ANY  (V, E)       (stays in HBM)
               w_ref,                # VMEM (1, Din+H, 4H)
               b_ref,                # VMEM (1, 1, 4H)
               h_in_ref,             # VMEM (1, B, H)
               c_in_ref,             # VMEM (1, B, H)
               h_out_ref,            # VMEM (1, B, H)
               c_out_ref,            # VMEM (1, B, H)
               emb_buf,              # VMEM scratch (B, E)  -- DMA landing pad (full rows)
               carry_ref,            # VMEM scratch (B, Din+H)
               dma_sems):            # DMA sems (B,)
        l = pl.program_id(0)

        # ---- grid step 0: fused embedding gather (manual DMA, table stays in HBM) ----
        @pl.when(l == 0)
        def _():
            for bi in range(B):      # B is small & static (single decode step)
                pltpu.make_async_copy(
                    emb_hbm.at[pl.ds(ids_ref[bi], 1)],   # (1, E) HBM row
                    emb_buf.at[pl.ds(bi, 1)],            # (1, E) full-row VMEM dest
                    dma_sems.at[bi]).start()
            for bi in range(B):
                pltpu.make_async_copy(
                    emb_hbm.at[pl.ds(ids_ref[bi], 1)],
                    emb_buf.at[pl.ds(bi, 1)],
                    dma_sems.at[bi]).wait()
            # Stage the embedded rows as the layer-0 input (zero any pad columns so
            # uninitialized VMEM can never leak NaNs through the zero weight rows).
            carry_ref[:, 0:E] = emb_buf[...].astype(carry_ref.dtype)
            if Din > E:
                carry_ref[:, E:Din] = jnp.zeros((B, Din - E), carry_ref.dtype)

        # Stage this layer's previous hidden state next to the layer input.
        carry_ref[:, Din:] = h_in_ref[0].astype(carry_ref.dtype)

        # One fused MXU matmul: (B, Din+H) @ (Din+H, 4H) -> (B, 4H), f32 accumulation.
        gates = (jnp.dot(carry_ref[...], w_ref[0],
                         preferred_element_type=jnp.float32)
                 + b_ref[0].astype(jnp.float32))

        # Gate math in float32 (PyTorch gate order i, f, g, o).
        i_g = jax.nn.sigmoid(gates[:, 0 * H:1 * H])
        f_g = jax.nn.sigmoid(gates[:, 1 * H:2 * H])
        g_g = jnp.tanh(gates[:, 2 * H:3 * H])
        o_g = jax.nn.sigmoid(gates[:, 3 * H:4 * H])

        c_new = f_g * c_in_ref[0].astype(jnp.float32) + i_g * g_g
        h_new = o_g * jnp.tanh(c_new)

        h_out_ref[0] = h_new.astype(h_out_ref.dtype)
        c_out_ref[0] = c_new.astype(c_out_ref.dtype)

        # Feed h_new to the next layer's input slot (stays resident in VMEM).
        carry_ref[:, 0:H] = h_new.astype(carry_ref.dtype)
        if Din > H:
            carry_ref[:, H:Din] = jnp.zeros((B, Din - H), carry_ref.dtype)

    return kernel


def lstm_stack(x_ids, emb, w_cat, b_cat, hidden, cell):
    """Runs embedding lookup + all LSTM layers for one decode step in one pallas_call."""
    L, B, H = hidden.shape
    _, E = emb.shape
    Din = w_cat.shape[1] - H

    kernel = _make_lstm_stack_kernel(B, E, H, Din)

    grid_spec = pltpu.PrefetchScalarGridSpec(
        num_scalar_prefetch=1,
        grid=(L,),
        in_specs=[
            pl.BlockSpec(memory_space=pl.ANY),                               # embedding (HBM)
            pl.BlockSpec((1, Din + H, 4 * H), lambda l, ids: (l, 0, 0)),     # W_cat[l]
            pl.BlockSpec((1, 1, 4 * H), lambda l, ids: (l, 0, 0)),           # b[l]
            pl.BlockSpec((1, B, H), lambda l, ids: (l, 0, 0)),               # hidden[l]
            pl.BlockSpec((1, B, H), lambda l, ids: (l, 0, 0)),               # cell[l]
        ],
        out_specs=(
            pl.BlockSpec((1, B, H), lambda l, ids: (l, 0, 0)),               # new hidden
            pl.BlockSpec((1, B, H), lambda l, ids: (l, 0, 0)),               # new cell
        ),
        scratch_shapes=[
            pltpu.VMEM((B, E), emb.dtype),                                   # gather landing pad
            pltpu.VMEM((B, Din + H), emb.dtype),                             # layer-input carry
            pltpu.SemaphoreType.DMA((B,)),                                   # gather sems
        ],
    )

    h_out, c_out = pl.pallas_call(
        kernel,
        out_shape=(jax.ShapeDtypeStruct((L, B, H), hidden.dtype),
                   jax.ShapeDtypeStruct((L, B, H), cell.dtype)),
        grid_spec=grid_spec,
        compiler_params=pltpu.CompilerParams(
            dimension_semantics=("arbitrary",)),                             # sequential layers
    )(x_ids, emb, w_cat, b_cat, hidden, cell)
    return h_out, c_out


# ------------------------------ tiled vocab projection ------------------------------

def _fc_kernel(h_ref, w_ref, b_ref, out_ref):
    # Weight is pre-transposed to (H, tV): lane-major for the MXU, no in-kernel .T.
    out_ref[...] = (jnp.dot(h_ref[...], w_ref[...],
                            preferred_element_type=jnp.float32)
                    + b_ref[...].astype(jnp.float32)).astype(out_ref.dtype)


def linear_tiled(h, w_t, b, *, tile_v=128):
    """out = h @ w_t + b, streaming the (H, V) weight in (H, tV) blocks over a vocab grid.

    tile_v sizing: 2 buffers x (tV * H * dtype_bytes) + (B, tV) output must fit the VMEM
    budget.  Raise tile_v (512-2048) with real vocab sizes to amortize per-step overhead;
    keep the total under ~half the per-TC VMEM (64 MiB on v7x).
    """
    B, H = h.shape
    V = w_t.shape[1]
    tV = min(tile_v, V)
    assert V % tV == 0, "pad vocab to a multiple of the vocab tile"

    return pl.pallas_call(
        _fc_kernel,
        out_shape=jax.ShapeDtypeStruct((B, V), jnp.float32),
        grid=(V // tV,),
        in_specs=[
            pl.BlockSpec((B, H), lambda j: (0, 0)),      # activations (resident: same block)
            pl.BlockSpec((H, tV), lambda j: (0, j)),     # streamed weight block
            pl.BlockSpec((1, tV), lambda j: (0, j)),     # bias block
        ],
        out_specs=pl.BlockSpec((B, tV), lambda j: (0, j)),
        compiler_params=pltpu.CompilerParams(
            dimension_semantics=("parallel",)),          # v7x: 2 TCs split the vocab tiles
    )(h, w_t, b)


# ------------------------------------ forward ------------------------------------

def decoder_forward(params, x_ids, hidden, cell, *, tile_v=128):
    """Mirrors Decoder.forward(x, hidden, cell) for a single decode step."""
    h_out, c_out = lstm_stack(x_ids, params["embedding"], params["w_cat"],
                              params["b_cat"], hidden, cell)
    last_h = h_out[h_out.shape[0] - 1]                   # (B, H) from the top layer
    preds = linear_tiled(last_h, params["fc_wt"], params["fc_b"], tile_v=tile_v)
    return preds, h_out, c_out


# ----------------------------- params (PyTorch convention) -----------------------------

def init_raw_params(key, vocab_size, embed_size, hidden_size, num_layers):
    ks = jax.random.split(key, 3 + 4 * num_layers)
    s = 0.1
    raw = {
        "embedding": s * jax.random.normal(ks[0], (vocab_size, embed_size), jnp.float32),
        "fc_w": s * jax.random.normal(ks[1], (vocab_size, hidden_size), jnp.float32),
        "fc_b": s * jax.random.normal(ks[2], (vocab_size,), jnp.float32),
        "lstm": [],
    }
    for l in range(num_layers):
        in_size = embed_size if l == 0 else hidden_size
        kw = ks[3 + 4 * l: 3 + 4 * (l + 1)]
        w_ih = s * jax.random.normal(kw[0], (4 * hidden_size, in_size), jnp.float32)
        w_hh = s * jax.random.normal(kw[1], (4 * hidden_size, hidden_size), jnp.float32)
        b_ih = s * jax.random.normal(kw[2], (4 * hidden_size,), jnp.float32)
        b_hh = s * jax.random.normal(kw[3], (4 * hidden_size,), jnp.float32)
        raw["lstm"].append((w_ih, w_hh, b_ih, b_hh))
    return raw


def pack_params(raw, dtype=jnp.float32):
    """One-time layout plumbing: transpose, concatenate and pad weights for the kernels.

    Use dtype=jnp.bfloat16 to stream weights at half bandwidth (f32 accumulation in-kernel).
    """
    V, E = raw["embedding"].shape
    L = len(raw["lstm"])
    H = raw["lstm"][0][1].shape[1]
    Din = max(E, H)                                       # uniform layer-input width

    w_cat = jnp.zeros((L, Din + H, 4 * H), dtype)
    b_cat = jnp.zeros((L, 1, 4 * H), dtype)
    for l, (w_ih, w_hh, b_ih, b_hh) in enumerate(raw["lstm"]):
        in_size = w_ih.shape[1]
        w_cat = w_cat.at[l, :in_size, :].set(w_ih.T.astype(dtype))   # zero rows kill pad cols
        w_cat = w_cat.at[l, Din:, :].set(w_hh.T.astype(dtype))
        b_cat = b_cat.at[l, 0, :].set((b_ih + b_hh).astype(dtype))

    return {
        "embedding": raw["embedding"].astype(dtype),
        "w_cat": w_cat,                                   # (L, Din+H, 4H)
        "b_cat": b_cat,                                   # (L, 1, 4H)
        "fc_wt": raw["fc_w"].T.astype(dtype),             # (H, V) — pre-transposed for MXU
        "fc_b": raw["fc_b"].reshape(1, -1).astype(dtype), # (1, V)
    }


# -------------------------------- pure-JAX reference --------------------------------

def decoder_forward_ref(raw, x_ids, hidden, cell):
    H = hidden.shape[-1]
    x = raw["embedding"][x_ids]
    new_h, new_c = [], []
    for l, (w_ih, w_hh, b_ih, b_hh) in enumerate(raw["lstm"]):
        gates = x @ w_ih.T + hidden[l] @ w_hh.T + b_ih + b_hh
        i_g = jax.nn.sigmoid(gates[:, 0 * H:1 * H])
        f_g = jax.nn.sigmoid(gates[:, 1 * H:2 * H])
        g_g = jnp.tanh(gates[:, 2 * H:3 * H])
        o_g = jax.nn.sigmoid(gates[:, 3 * H:4 * H])
        c_l = f_g * cell[l] + i_g * g_g
        h_l = o_g * jnp.tanh(c_l)
        new_h.append(h_l)
        new_c.append(c_l)
        x = h_l
    preds = x @ raw["fc_w"].T + raw["fc_b"]
    return preds, jnp.stack(new_h, 0), jnp.stack(new_c, 0)


# --------------------------------------- main ---------------------------------------

if __name__ == "__main__":
    vocab_size, embed_size, hidden_size, num_layers = 512, 16, 32, 2
    batch = 4

    key = jax.random.PRNGKey(0)
    k_par, k_x, k_h, k_c = jax.random.split(key, 4)

    raw = init_raw_params(k_par, vocab_size, embed_size, hidden_size, num_layers)
    params = pack_params(raw)                            # f32 here for exact checking

    x_ids = jax.random.randint(k_x, (batch,), 0, vocab_size, jnp.int32)
    hidden = jax.random.normal(k_h, (num_layers, batch, hidden_size), jnp.float32)
    cell = jax.random.normal(k_c, (num_layers, batch, hidden_size), jnp.float32)

    preds, h_out, c_out = decoder_forward(params, x_ids, hidden, cell, tile_v=128)
    jax.block_until_ready((preds, h_out, c_out))

    preds_r, h_r, c_r = decoder_forward_ref(raw, x_ids, hidden, cell)

    assert preds.shape == (batch, vocab_size)
    assert h_out.shape == (num_layers, batch, hidden_size)
    assert c_out.shape == (num_layers, batch, hidden_size)
    assert jnp.allclose(preds, preds_r, atol=1e-4, rtol=1e-4)
    assert jnp.allclose(h_out, h_r, atol=1e-4, rtol=1e-4)
    assert jnp.allclose(c_out, c_r, atol=1e-4, rtol=1e-4)

    print("KERNEL_OK")
</pallas_src>

<mosaic_0001>
module attributes {stable_mosaic.version = 11 : i64} {
  func.func @kernel(%arg0: i32, %arg1: memref<4xi32, #tpu.memory_space<smem>>, %arg2: memref<512x16xf32, #tpu.memory_space<any>>, %arg3: memref<1x64x128xf32, #tpu.memory_space<vmem>>, %arg4: memref<1x1x128xf32, #tpu.memory_space<vmem>>, %arg5: memref<1x4x32xf32, #tpu.memory_space<vmem>>, %arg6: memref<1x4x32xf32, #tpu.memory_space<vmem>>, %arg7: memref<1x4x32xf32, #tpu.memory_space<vmem>>, %arg8: memref<1x4x32xf32, #tpu.memory_space<vmem>>, %arg9: memref<4x16xf32, #tpu.memory_space<vmem>>, %arg10: memref<4x64xf32, #tpu.memory_space<vmem>>, %arg11: memref<4x!tpu.dma_semaphore, #tpu.memory_space<semaphore_mem>>) attributes {dimension_semantics = [#tpu.dimension_semantics<arbitrary>], iteration_bounds = array<i64: 2>, scalar_prefetch = 1 : i64, scratch_operands = 3 : i64, tpu.core_type = #tpu.core_type<tc>, window_params = [{}, {transform_indices = @transform_1, window_bounds = array<i64: 1, 64, 128>}, {transform_indices = @transform_2, window_bounds = array<i64: 1, 1, 128>}, {transform_indices = @transform_3, window_bounds = array<i64: 1, 4, 32>}, {transform_indices = @transform_4, window_bounds = array<i64: 1, 4, 32>}, {transform_indices = @transform_5, window_bounds = array<i64: 1, 4, 32>}, {transform_indices = @transform_6, window_bounds = array<i64: 1, 4, 32>}]} {
    %c0_i32 = arith.constant 0 : i32
    %0 = arith.cmpi eq, %arg0, %c0_i32 : i32
    %1 = arith.extui %0 : i1 to i32
    %c0_i32_0 = arith.constant 0 : i32
    %2 = arith.cmpi ne, %1, %c0_i32_0 : i32
    scf.if %2 {
      %c0_26 = arith.constant 0 : index
      %48 = memref.load %arg1[%c0_26] : memref<4xi32, #tpu.memory_space<smem>>
      %c0_i32_27 = arith.constant 0 : i32
      %c0_i32_28 = arith.constant 0 : i32
      %49 = tpu.memref_slice %arg2[%48, %c0_i32_28] : memref<512x16xf32, #tpu.memory_space<any>> -> memref<1x16xf32, #tpu.memory_space<any>>
      %c0_i32_29 = arith.constant 0 : i32
      %c0_i32_30 = arith.constant 0 : i32
      %50 = tpu.memref_slice %arg9[%c0_i32_29, %c0_i32_30] : memref<4x16xf32, #tpu.memory_space<vmem>> -> memref<1x16xf32, #tpu.memory_space<vmem>>
      %51 = tpu.memref_slice %arg11[%c0_i32_27] : memref<4x!tpu.dma_semaphore, #tpu.memory_space<semaphore_mem>> -> memref<1x!tpu.dma_semaphore, #tpu.memory_space<semaphore_mem>>
      %52 = tpu.memref_squeeze %51 : memref<1x!tpu.dma_semaphore, #tpu.memory_space<semaphore_mem>> -> memref<!tpu.dma_semaphore, #tpu.memory_space<semaphore_mem>>
      tpu.enqueue_dma source(%49 : memref<1x16xf32, #tpu.memory_space<any>>) target(%50 : memref<1x16xf32, #tpu.memory_space<vmem>>) target_semaphore(%52 : memref<!tpu.dma_semaphore, #tpu.memory_space<semaphore_mem>>)
      %c1 = arith.constant 1 : index
      %53 = memref.load %arg1[%c1] : memref<4xi32, #tpu.memory_space<smem>>
      %c1_i32 = arith.constant 1 : i32
      %c0_i32_31 = arith.constant 0 : i32
      %54 = tpu.memref_slice %arg2[%53, %c0_i32_31] : memref<512x16xf32, #tpu.memory_space<any>> -> memref<1x16xf32, #tpu.memory_space<any>>
      %c1_i32_32 = arith.constant 1 : i32
      %c0_i32_33 = arith.constant 0 : i32
      %55 = tpu.memref_slice %arg9[%c1_i32_32, %c0_i32_33] : memref<4x16xf32, #tpu.memory_space<vmem>> -> memref<1x16xf32, #tpu.memory_space<vmem>>
      %56 = tpu.memref_slice %arg11[%c1_i32] : memref<4x!tpu.dma_semaphore, #tpu.memory_space<semaphore_mem>> -> memref<1x!tpu.dma_semaphore, #tpu.memory_space<semaphore_mem>>
      %57 = tpu.memref_squeeze %56 : memref<1x!tpu.dma_semaphore, #tpu.memory_space<semaphore_mem>> -> memref<!tpu.dma_semaphore, #tpu.memory_space<semaphore_mem>>
      tpu.enqueue_dma source(%54 : memref<1x16xf32, #tpu.memory_space<any>>) target(%55 : memref<1x16xf32, #tpu.memory_space<vmem>>) target_semaphore(%57 : memref<!tpu.dma_semaphore, #tpu.memory_space<semaphore_mem>>)
      %c2 = arith.constant 2 : index
      %58 = memref.load %arg1[%c2] : memref<4xi32, #tpu.memory_space<smem>>
      %c2_i32 = arith.constant 2 : i32
      %c0_i32_34 = arith.constant 0 : i32
      %59 = tpu.memref_slice %arg2[%58, %c0_i32_34] : memref<512x16xf32, #tpu.memory_space<any>> -> memref<1x16xf32, #tpu.memory_space<any>>
      %c2_i32_35 = arith.constant 2 : i32
      %c0_i32_36 = arith.constant 0 : i32
      %60 = tpu.memref_slice %arg9[%c2_i32_35, %c0_i32_36] : memref<4x16xf32, #tpu.memory_space<vmem>> -> memref<1x16xf32, #tpu.memory_space<vmem>>
      %61 = tpu.memref_slice %arg11[%c2_i32] : memref<4x!tpu.dma_semaphore, #tpu.memory_space<semaphore_mem>> -> memref<1x!tpu.dma_semaphore, #tpu.memory_space<semaphore_mem>>
      %62 = tpu.memref_squeeze %61 : memref<1x!tpu.dma_semaphore, #tpu.memory_space<semaphore_mem>> -> memref<!tpu.dma_semaphore, #tpu.memory_space<semaphore_mem>>
      tpu.enqueue_dma source(%59 : memref<1x16xf32, #tpu.memory_space<any>>) target(%60 : memref<1x16xf32, #tpu.memory_space<vmem>>) target_semaphore(%62 : memref<!tpu.dma_semaphore, #tpu.memory_space<semaphore_mem>>)
      %c3 = arith.constant 3 : index
      %63 = memref.load %arg1[%c3] : memref<4xi32, #tpu.memory_space<smem>>
      %c3_i32 = arith.constant 3 : i32
      %c0_i32_37 = arith.constant 0 : i32
      %64 = tpu.memref_slice %arg2[%63, %c0_i32_37] : memref<512x16xf32, #tpu.memory_space<any>> -> memref<1x16xf32, #tpu.memory_space<any>>
      %c3_i32_38 = arith.constant 3 : i32
      %c0_i32_39 = arith.constant 0 : i32
      %65 = tpu.memref_slice %arg9[%c3_i32_38, %c0_i32_39] : memref<4x16xf32, #tpu.memory_space<vmem>> -> memref<1x16xf32, #tpu.memory_space<vmem>>
      %66 = tpu.memref_slice %arg11[%c3_i32] : memref<4x!tpu.dma_semaphore, #tpu.memory_space<semaphore_mem>> -> memref<1x!tpu.dma_semaphore, #tpu.memory_space<semaphore_mem>>
      %67 = tpu.memref_squeeze %66 : memref<1x!tpu.dma_semaphore, #tpu.memory_space<semaphore_mem>> -> memref<!tpu.dma_semaphore, #tpu.memory_space<semaphore_mem>>
      tpu.enqueue_dma source(%64 : memref<1x16xf32, #tpu.memory_space<any>>) target(%65 : memref<1x16xf32, #tpu.memory_space<vmem>>) target_semaphore(%67 : memref<!tpu.dma_semaphore, #tpu.memory_space<semaphore_mem>>)
      %c0_40 = arith.constant 0 : index
      %68 = memref.load %arg1[%c0_40] : memref<4xi32, #tpu.memory_space<smem>>
      %c0_i32_41 = arith.constant 0 : i32
      %c0_i32_42 = arith.constant 0 : i32
      %69 = tpu.memref_slice %arg2[%68, %c0_i32_42] : memref<512x16xf32, #tpu.memory_space<any>> -> memref<1x16xf32, #tpu.memory_space<any>>
      %c0_i32_43 = arith.constant 0 : i32
      %c0_i32_44 = arith.constant 0 : i32
      %70 = tpu.memref_slice %arg9[%c0_i32_43, %c0_i32_44] : memref<4x16xf32, #tpu.memory_space<vmem>> -> memref<1x16xf32, #tpu.memory_space<vmem>>
      %71 = tpu.memref_slice %arg11[%c0_i32_41] : memref<4x!tpu.dma_semaphore, #tpu.memory_space<semaphore_mem>> -> memref<1x!tpu.dma_semaphore, #tpu.memory_space<semaphore_mem>>
      %72 = tpu.memref_squeeze %71 : memref<1x!tpu.dma_semaphore, #tpu.memory_space<semaphore_mem>> -> memref<!tpu.dma_semaphore, #tpu.memory_space<semaphore_mem>>
      tpu.wait_dma2 semaphore(%72 : memref<!tpu.dma_semaphore, #tpu.memory_space<semaphore_mem>>) src(%69 : memref<1x16xf32, #tpu.memory_space<any>>) dst(%70 : memref<1x16xf32, #tpu.memory_space<vmem>>)
      %c1_45 = arith.constant 1 : index
      %73 = memref.load %arg1[%c1_45] : memref<4xi32, #tpu.memory_space<smem>>
      %c1_i32_46 = arith.constant 1 : i32
      %c0_i32_47 = arith.constant 0 : i32
      %74 = tpu.memref_slice %arg2[%73, %c0_i32_47] : memref<512x16xf32, #tpu.memory_space<any>> -> memref<1x16xf32, #tpu.memory_space<any>>
      %c1_i32_48 = arith.constant 1 : i32
      %c0_i32_49 = arith.constant 0 : i32
      %75 = tpu.memref_slice %arg9[%c1_i32_48, %c0_i32_49] : memref<4x16xf32, #tpu.memory_space<vmem>> -> memref<1x16xf32, #tpu.memory_space<vmem>>
      %76 = tpu.memref_slice %arg11[%c1_i32_46] : memref<4x!tpu.dma_semaphore, #tpu.memory_space<semaphore_mem>> -> memref<1x!tpu.dma_semaphore, #tpu.memory_space<semaphore_mem>>
      %77 = tpu.memref_squeeze %76 : memref<1x!tpu.dma_semaphore, #tpu.memory_space<semaphore_mem>> -> memref<!tpu.dma_semaphore, #tpu.memory_space<semaphore_mem>>
      tpu.wait_dma2 semaphore(%77 : memref<!tpu.dma_semaphore, #tpu.memory_space<semaphore_mem>>) src(%74 : memref<1x16xf32, #tpu.memory_space<any>>) dst(%75 : memref<1x16xf32, #tpu.memory_space<vmem>>)
      %c2_50 = arith.constant 2 : index
      %78 = memref.load %arg1[%c2_50] : memref<4xi32, #tpu.memory_space<smem>>
      %c2_i32_51 = arith.constant 2 : i32
      %c0_i32_52 = arith.constant 0 : i32
      %79 = tpu.memref_slice %arg2[%78, %c0_i32_52] : memref<512x16xf32, #tpu.memory_space<any>> -> memref<1x16xf32, #tpu.memory_space<any>>
      %c2_i32_53 = arith.constant 2 : i32
      %c0_i32_54 = arith.constant 0 : i32
      %80 = tpu.memref_slice %arg9[%c2_i32_53, %c0_i32_54] : memref<4x16xf32, #tpu.memory_space<vmem>> -> memref<1x16xf32, #tpu.memory_space<vmem>>
      %81 = tpu.memref_slice %arg11[%c2_i32_51] : memref<4x!tpu.dma_semaphore, #tpu.memory_space<semaphore_mem>> -> memref<1x!tpu.dma_semaphore, #tpu.memory_space<semaphore_mem>>
      %82 = tpu.memref_squeeze %81 : memref<1x!tpu.dma_semaphore, #tpu.memory_space<semaphore_mem>> -> memref<!tpu.dma_semaphore, #tpu.memory_space<semaphore_mem>>
      tpu.wait_dma2 semaphore(%82 : memref<!tpu.dma_semaphore, #tpu.memory_space<semaphore_mem>>) src(%79 : memref<1x16xf32, #tpu.memory_space<any>>) dst(%80 : memref<1x16xf32, #tpu.memory_space<vmem>>)
      %c3_55 = arith.constant 3 : index
      %83 = memref.load %arg1[%c3_55] : memref<4xi32, #tpu.memory_space<smem>>
      %c3_i32_56 = arith.constant 3 : i32
      %c0_i32_57 = arith.constant 0 : i32
      %84 = tpu.memref_slice %arg2[%83, %c0_i32_57] : memref<512x16xf32, #tpu.memory_space<any>> -> memref<1x16xf32, #tpu.memory_space<any>>
      %c3_i32_58 = arith.constant 3 : i32
      %c0_i32_59 = arith.constant 0 : i32
      %85 = tpu.memref_slice %arg9[%c3_i32_58, %c0_i32_59] : memref<4x16xf32, #tpu.memory_space<vmem>> -> memref<1x16xf32, #tpu.memory_space<vmem>>
      %86 = tpu.memref_slice %arg11[%c3_i32_56] : memref<4x!tpu.dma_semaphore, #tpu.memory_space<semaphore_mem>> -> memref<1x!tpu.dma_semaphore, #tpu.memory_space<semaphore_mem>>
      %87 = tpu.memref_squeeze %86 : memref<1x!tpu.dma_semaphore, #tpu.memory_space<semaphore_mem>> -> memref<!tpu.dma_semaphore, #tpu.memory_space<semaphore_mem>>
      tpu.wait_dma2 semaphore(%87 : memref<!tpu.dma_semaphore, #tpu.memory_space<semaphore_mem>>) src(%84 : memref<1x16xf32, #tpu.memory_space<any>>) dst(%85 : memref<1x16xf32, #tpu.memory_space<vmem>>)
      %c0_60 = arith.constant 0 : index
      %c0_61 = arith.constant 0 : index
      %88 = vector.load %arg9[%c0_60, %c0_61] : memref<4x16xf32, #tpu.memory_space<vmem>>, vector<4x16xf32>
      %c0_62 = arith.constant 0 : index
      %c0_63 = arith.constant 0 : index
      %89 = vector.load %arg10[%c0_62, %c0_63] : memref<4x64xf32, #tpu.memory_space<vmem>>, vector<4x16xf32>
      tpu.vector_store %arg10[%c0_62, %c0_63], %88 {strides = array<i32>} : memref<4x64xf32, #tpu.memory_space<vmem>>, vector<4x16xf32>,
      %cst_64 = arith.constant 0.000000e+00 : f32
      %90 = vector.broadcast %cst_64 : f32 to vector<4x16xf32>
      %c0_65 = arith.constant 0 : index
      %c16 = arith.constant 16 : index
      %91 = vector.load %arg10[%c0_65, %c16] : memref<4x64xf32, #tpu.memory_space<vmem>>, vector<4x16xf32>
      tpu.vector_store %arg10[%c0_65, %c16], %90 {strides = array<i32>} : memref<4x64xf32, #tpu.memory_space<vmem>>, vector<4x16xf32>,
    } else {
    }
    %c0 = arith.constant 0 : index
    %c0_1 = arith.constant 0 : index
    %c0_2 = arith.constant 0 : index
    %3 = vector.load %arg5[%c0, %c0_1, %c0_2] : memref<1x4x32xf32, #tpu.memory_space<vmem>>, vector<1x4x32xf32>
    %4 = vector.shape_cast %3 : vector<1x4x32xf32> to vector<4x32xf32>
    %c0_3 = arith.constant 0 : index
    %c32 = arith.constant 32 : index
    %5 = vector.load %arg10[%c0_3, %c32] : memref<4x64xf32, #tpu.memory_space<vmem>>, vector<4x32xf32>
    tpu.vector_store %arg10[%c0_3, %c32], %4 {strides = array<i32>} : memref<4x64xf32, #tpu.memory_space<vmem>>, vector<4x32xf32>,
    %c0_4 = arith.constant 0 : index
    %c0_5 = arith.constant 0 : index
    %6 = vector.load %arg10[%c0_4, %c0_5] : memref<4x64xf32, #tpu.memory_space<vmem>>, vector<4x64xf32>
    %c0_6 = arith.constant 0 : index
    %c0_7 = arith.constant 0 : index
    %c0_8 = arith.constant 0 : index
    %7 = vector.load %arg3[%c0_6, %c0_7, %c0_8] : memref<1x64x128xf32, #tpu.memory_space<vmem>>, vector<1x64x128xf32>
    %8 = vector.shape_cast %7 : vector<1x64x128xf32> to vector<64x128xf32>
    %cst = arith.constant dense<0.000000e+00> : vector<4x128xf32>
    %9 = tpu.matmul %6, %8, %cst {dimension_numbers = #tpu.dot_dimension_numbers<[1], [0], [0], [1], [0, 0, 1, 1], [], []>} : vector<4x64xf32>, vector<64x128xf32>, vector<4x128xf32> -> vector<4x128xf32>
    %c0_9 = arith.constant 0 : index
    %c0_10 = arith.constant 0 : index
    %c0_11 = arith.constant 0 : index
    %10 = vector.load %arg4[%c0_9, %c0_10, %c0_11] : memref<1x1x128xf32, #tpu.memory_space<vmem>>, vector<1x1x128xf32>
    %11 = vector.shape_cast %10 : vector<1x1x128xf32> to vector<1x128xf32>
    %12 = vector.broadcast %11 : vector<1x128xf32> to vector<4x128xf32>
    %13 = arith.addf %9, %12 : vector<4x128xf32>
    %14 = vector.extract_strided_slice %13 {offsets = [0, 0], sizes = [4, 32], strides = [1, 1]} : vector<4x128xf32> to vector<4x32xf32>
    %15 = arith.negf %14 : vector<4x32xf32>
    %16 = math.exp %15 : vector<4x32xf32>
    %cst_12 = arith.constant 1.000000e+00 : f32
    %17 = vector.broadcast %cst_12 : f32 to vector<4x32xf32>
    %18 = arith.addf %17, %16 : vector<4x32xf32>
    %19 = arith.divf %17, %18 : vector<4x32xf32>
    %20 = vector.extract_strided_slice %13 {offsets = [0, 32], sizes = [4, 32], strides = [1, 1]} : vector<4x128xf32> to vector<4x32xf32>
    %21 = arith.negf %20 : vector<4x32xf32>
    %22 = math.exp %21 : vector<4x32xf32>
    %cst_13 = arith.constant 1.000000e+00 : f32
    %23 = vector.broadcast %cst_13 : f32 to vector<4x32xf32>
    %24 = arith.addf %23, %22 : vector<4x32xf32>
    %25 = arith.divf %23, %24 : vector<4x32xf32>
    %26 = vector.extract_strided_slice %13 {offsets = [0, 64], sizes = [4, 32], strides = [1, 1]} : vector<4x128xf32> to vector<4x32xf32>
    %27 = math.tanh %26 : vector<4x32xf32>
    %28 = vector.extract_strided_slice %13 {offsets = [0, 96], sizes = [4, 32], strides = [1, 1]} : vector<4x128xf32> to vector<4x32xf32>
    %29 = arith.negf %28 : vector<4x32xf32>
    %30 = math.exp %29 : vector<4x32xf32>
    %cst_14 = arith.constant 1.000000e+00 : f32
    %31 = vector.broadcast %cst_14 : f32 to vector<4x32xf32>
    %32 = arith.addf %31, %30 : vector<4x32xf32>
    %33 = arith.divf %31, %32 : vector<4x32xf32>
    %c0_15 = arith.constant 0 : index
    %c0_16 = arith.constant 0 : index
    %c0_17 = arith.constant 0 : index
    %34 = vector.load %arg6[%c0_15, %c0_16, %c0_17] : memref<1x4x32xf32, #tpu.memory_space<vmem>>, vector<1x4x32xf32>
    %35 = vector.shape_cast %34 : vector<1x4x32xf32> to vector<4x32xf32>
    %36 = arith.mulf %25, %35 : vector<4x32xf32>
    %37 = arith.mulf %19, %27 : vector<4x32xf32>
    %38 = arith.addf %36, %37 : vector<4x32xf32>
    %39 = math.tanh %38 : vector<4x32xf32>
    %40 = arith.mulf %33, %39 : vector<4x32xf32>
    %c0_18 = arith.constant 0 : index
    %c0_19 = arith.constant 0 : index
    %c0_20 = arith.constant 0 : index
    %41 = vector.load %arg7[%c0_18, %c0_19, %c0_20] : memref<1x4x32xf32, #tpu.memory_space<vmem>>, vector<1x4x32xf32>
    %42 = vector.shape_cast %41 : vector<1x4x32xf32> to vector<4x32xf32>
    %43 = vector.shape_cast %40 : vector<4x32xf32> to vector<1x4x32xf32>
    tpu.vector_store %arg7[%c0_18, %c0_19, %c0_20], %43 {strides = array<i32>} : memref<1x4x32xf32, #tpu.memory_space<vmem>>, vector<1x4x32xf32>,
    %c0_21 = arith.constant 0 : index
    %c0_22 = arith.constant 0 : index
    %c0_23 = arith.constant 0 : index
    %44 = vector.load %arg8[%c0_21, %c0_22, %c0_23] : memref<1x4x32xf32, #tpu.memory_space<vmem>>, vector<1x4x32xf32>
    %45 = vector.shape_cast %44 : vector<1x4x32xf32> to vector<4x32xf32>
    %46 = vector.shape_cast %38 : vector<4x32xf32> to vector<1x4x32xf32>
    tpu.vector_store %arg8[%c0_21, %c0_22, %c0_23], %46 {strides = array<i32>} : memref<1x4x32xf32, #tpu.memory_space<vmem>>, vector<1x4x32xf32>,
    %c0_24 = arith.constant 0 : index
    %c0_25 = arith.constant 0 : index
    %47 = vector.load %arg10[%c0_24, %c0_25] : memref<4x64xf32, #tpu.memory_space<vmem>>, vector<4x32xf32>
    tpu.vector_store %arg10[%c0_24, %c0_25], %40 {strides = array<i32>} : memref<4x64xf32, #tpu.memory_space<vmem>>, vector<4x32xf32>,
    return
  }
  func.func @transform_1(%arg0: i32, %arg1: memref<4xi32, #tpu.memory_space<smem>>) -> (i32, i32, i32) {
    %c0_i32 = arith.constant 0 : i32
    %c0_i32_0 = arith.constant 0 : i32
    %c0_i32_1 = arith.constant 0 : i32
    return %arg0, %c0_i32, %c0_i32_0 : i32, i32, i32
  }
  func.func @transform_2(%arg0: i32, %arg1: memref<4xi32, #tpu.memory_space<smem>>) -> (i32, i32, i32) {
    %c0_i32 = arith.constant 0 : i32
    %c0_i32_0 = arith.constant 0 : i32
    %c0_i32_1 = arith.constant 0 : i32
    return %arg0, %c0_i32, %c0_i32_0 : i32, i32, i32
  }
  func.func @transform_3(%arg0: i32, %arg1: memref<4xi32, #tpu.memory_space<smem>>) -> (i32, i32, i32) {
    %c0_i32 = arith.constant 0 : i32
    %c0_i32_0 = arith.constant 0 : i32
    %c0_i32_1 = arith.constant 0 : i32
    return %arg0, %c0_i32, %c0_i32_0 : i32, i32, i32
  }
  func.func @transform_4(%arg0: i32, %arg1: memref<4xi32, #tpu.memory_space<smem>>) -> (i32, i32, i32) {
    %c0_i32 = arith.constant 0 : i32
    %c0_i32_0 = arith.constant 0 : i32
    %c0_i32_1 = arith.constant 0 : i32
    return %arg0, %c0_i32, %c0_i32_0 : i32, i32, i32
  }
  func.func @transform_5(%arg0: i32, %arg1: memref<4xi32, #tpu.memory_space<smem>>) -> (i32, i32, i32) {
    %c0_i32 = arith.constant 0 : i32
    %c0_i32_0 = arith.constant 0 : i32
    %c0_i32_1 = arith.constant 0 : i32
    return %arg0, %c0_i32, %c0_i32_0 : i32, i32, i32
  }
  func.func @transform_6(%arg0: i32, %arg1: memref<4xi32, #tpu.memory_space<smem>>) -> (i32, i32, i32) {
    %c0_i32 = arith.constant 0 : i32
    %c0_i32_0 = arith.constant 0 : i32
    %c0_i32_1 = arith.constant 0 : i32
    return %arg0, %c0_i32, %c0_i32_0 : i32, i32, i32
  }
}

</mosaic_0001>

<llo_original>
// kernel: tpu_custom_call.1
$region0: #{tpu_custom_call.1}
  #allocation0 [shape = 'u32[]', space=smem, size = 0x4, offset = 0x4, fixed_abs, tag = 'smem constant byte address 0x4 - core index']
  #allocation1 [shape = 'u32[72,128]{1,0:T(1,128)}', space=vmem, size = 0x9000, scoped, tag = 'internal scratch']
  #allocation2 [shape = 'f32[4,16]{1,0:T(4,128)}', space=vmem, size = 0x800, scoped, tag = 'scratch operand']
  #allocation3 [shape = 'f32[4,64]{1,0:T(4,128)}', space=vmem, size = 0x800, scoped, tag = 'scratch operand']
  #allocation4 [shape = 's32[4]{0}', space=sflag, size = 0x10, scoped, tag = 'scratch operand']
  #allocation5 [shape = 's32[1]{0}', space=sflag, size = 0x4, scoped, tag = 'scoped memory for tpu_custom_call.1']
  #allocation6 [shape = 'u8[512]{0}', space=smem, size = 0x200, scoped, tag = 'prefetched SMEM operand 0']
  #allocation11 [shape = 's32[]', space=sflag, size = 0x4, offset = 0, fixed_abs, tag = 'sflag constant byte address 0x0 - dummy sync flag']
  #allocation12 [shape = 's32[]', space=sflag, size = 0x4, offset = 0, fixed_abs, tag = 'sflag constant byte address 0x0 - dummy sync flag']
  #allocation13 [shape = 's32[]', space=sflag, size = 0x4, offset = 0, fixed_abs, tag = 'sflag constant byte address 0x0 - dummy sync flag']
  #allocation14 [shape = 's32[]', space=sflag, size = 0x4, offset = 0, fixed_abs, tag = 'sflag constant byte address 0x0 - dummy sync flag']
  %s0 = inlined_call_operand.vmem [shape: s32[4], index: 0, kind: input, shape index: {}]
  %s1 = inlined_call_operand.vmem [shape: f32[512,16], index: 1, kind: input, shape index: {}]
  %s2 = inlined_call_operand.vmem [shape: f32[2,64,128], index: 2, kind: input, shape index: {}]
  %s3 = inlined_call_operand.vmem [shape: f32[2,1,128], index: 3, kind: input, shape index: {}]
  %s4 = inlined_call_operand.vmem [shape: f32[2,4,32], index: 4, kind: input, shape index: {}]
  %s5 = inlined_call_operand.vmem [shape: f32[2,4,32], index: 5, kind: input, shape index: {}]
  %s6 = inlined_call_operand.hbm [shape: f32[2,4,32], index: 6, kind: output, shape index: {0}]
  %s7 = inlined_call_operand.hbm [shape: f32[2,4,32], index: 7, kind: output, shape index: {1}]
  %8 = xla_tuple %s6, %s7
  %s9 = sld [smem:[#allocation0]]
  $region181: #{tpu_custom_call.1} parent=0
    _
  %s11 = ssub.s32 1, %s9
  %s12 = scalar_select 0, %s11, %s9
  %s14 = sshll.u32 %s0, 4
  %s15 = int_to_ptr.vmem [resolvable:$true] %s14
  %17 = dma.vmem_to_smem %s15, 16, [#allocation6], [#allocation5]
  %19 = dma.done [#allocation5], 16
  %20 = sfence
  $region1: #{tpu_custom_call.1} parent=0
    #allocation7 [shape = 'u8[4096]{0}', space=vmem, size = 0x1000, scoped, tag = 'output window, operand 0']
    #allocation8 [shape = 's32[2]{0}', space=sflag, size = 0x8, scoped, tag = 'scoped memory for tpu_custom_call.1']
    #allocation9 [shape = 'u8[4096]{0}', space=vmem, size = 0x1000, scoped, tag = 'output window, operand 1']
    #allocation10 [shape = 's32[2]{0}', space=sflag, size = 0x8, scoped, tag = 'scoped memory for tpu_custom_call.1']
    %21 = vsyncpa [#allocation8], 0
    %s22 = scalar_lea.sflag [#allocation8], 1
    %23 = vsyncpa %s22, 0
    %24 = vsyncpa [#allocation10], 0
    %s25 = scalar_lea.sflag [#allocation10], 1
    %26 = vsyncpa %s25, 0
    loop: start=0, step=1, limit=4
    $region2: #{tpu_custom_call.1} parent=1 // loop_pre_header
      _
    $region3: #{tpu_custom_call.1} parent=1 // loop_header
      %s28 = sphi 0, %s32
      %p29 = scmp.ge.s32.totalorder %s28, 4
      %s38 = sphi 0, %s40
      %s41 = sphi 0, %s38
      %s42 = sphi 0, %s41
      %s58 = sphi 0, %s42
      %s64 = sphi 0, %s66
      %s67 = sphi 0, %s64
      %s68 = sphi 0, %s67
      %s84 = sphi 0, %s68
      %s90 = sphi 0, %s92
      %s93 = sphi 0, %s90
      %s94 = sphi 0, %s93
      %s110 = sphi 0, %s94
      %s116 = sphi 0, %s118
      %s119 = sphi 0, %s116
      %s120 = sphi 0, %s119
      %s136 = sphi 0, %s120
      %s142 = sphi 0, %s144
      %s145 = sphi 0, %s142
      %s146 = sphi 0, %s145
      %s162 = sphi 0, %s146
      %s168 = sphi 0, %s170
      %s171 = sphi 0, %s168
      %s172 = sphi 0, %s171
      %s188 = sphi 0, %s172
    $region4: #{tpu_custom_call.1} parent=1 // loop_header_branch
      %31 = sbr.rel (%p29) target = $region8
    $region5: #{tpu_custom_call.1} parent=1 // loop_body
      %s33 = ssub.s32 %s28, 1
      %s34 = ssub.s32 %s28, 2
      %s35 = sadd.s32 %s28, 1
      %s36 = ssub.s32 %s28, %s35
      %p37 = scmp.eq.s32.totalorder %s36, 0
      %s39 = sadd.s32 %s38, 1
      %s40 = scalar_select %p37, %s38, %s39
      %p43 = pneg %p37
      %p44 = scmp.eq.s32.totalorder %s28, 1
      %p45 = por %p43, %p44
      %p46 = scmp.ne.s32.totalorder %s38, %s41
      %p47 = scmp.eq.s32.totalorder %s28, 0
      %p48 = por %p46, %p47
      %p49 = scmp.ne.s32.totalorder %s38, %s41
      %p50 = scmp.eq.s32.totalorder %s33, 1
      %p51 = por %p49, %p50
      %p52 = scmp.ne.s32.totalorder %s41, %s42
      %p53 = scmp.eq.s32.totalorder %s33, 0
      %p54 = por %p52, %p53
      %p55 = scmp.ne.s32.totalorder %s41, %s42
      %p56 = scmp.eq.s32.totalorder %s34, 1
      %p57 = por %p55, %p56
      %p59 = scmp.ne.s32.totalorder %s42, %s58
      %p60 = scmp.eq.s32.totalorder %s34, 0
      %p61 = por %p59, %p60
      %s62 = ssub.s32 %s28, %s35
      %p63 = scmp.eq.s32.totalorder %s62, 0
      %s65 = sadd.s32 %s64, 1
      %s66 = scalar_select %p63, %s64, %s65
      %p69 = pneg %p63
      %p70 = scmp.eq.s32.totalorder %s28, 1
      %p71 = por %p69, %p70
      %p72 = scmp.ne.s32.totalorder %s64, %s67
      %p73 = scmp.eq.s32.totalorder %s28, 0
      %p74 = por %p72, %p73
      %p75 = scmp.ne.s32.totalorder %s64, %s67
      %p76 = scmp.eq.s32.totalorder %s33, 1
      %p77 = por %p75, %p76
      %p78 = scmp.ne.s32.totalorder %s67, %s68
      %p79 = scmp.eq.s32.totalorder %s33, 0
      %p80 = por %p78, %p79
      %p81 = scmp.ne.s32.totalorder %s67, %s68
      %p82 = scmp.eq.s32.totalorder %s34, 1
      %p83 = por %p81, %p82
      %p85 = scmp.ne.s32.totalorder %s68, %s84
      %p86 = scmp.eq.s32.totalorder %s34, 0
      %p87 = por %p85, %p86
      %s88 = ssub.s32 %s28, %s35
      %p89 = scmp.eq.s32.totalorder %s88, 0
      %s91 = sadd.s32 %s90, 1
      %s92 = scalar_select %p89, %s90, %s91
      %p95 = pneg %p89
      %p96 = scmp.eq.s32.totalorder %s28, 1
      %p97 = por %p95, %p96
      %p98 = scmp.ne.s32.totalorder %s90, %s93
      %p99 = scmp.eq.s32.totalorder %s28, 0
      %p100 = por %p98, %p99
      %p101 = scmp.ne.s32.totalorder %s90, %s93
      %p102 = scmp.eq.s32.totalorder %s33, 1
      %p103 = por %p101, %p102
      %p104 = scmp.ne.s32.totalorder %s93, %s94
      %p105 = scmp.eq.s32.totalorder %s33, 0
      %p106 = por %p104, %p105
      %p107 = scmp.ne.s32.totalorder %s93, %s94
      %p108 = scmp.eq.s32.totalorder %s34, 1
      %p109 = por %p107, %p108
      %p111 = scmp.ne.s32.totalorder %s94, %s110
      %p112 = scmp.eq.s32.totalorder %s34, 0
      %p113 = por %p111, %p112
      %s114 = ssub.s32 %s28, %s35
      %p115 = scmp.eq.s32.totalorder %s114, 0
      %s117 = sadd.s32 %s116, 1
      %s118 = scalar_select %p115, %s116, %s117
      %p121 = pneg %p115
      %p122 = scmp.eq.s32.totalorder %s28, 1
      %p123 = por %p121, %p122
      %p124 = scmp.ne.s32.totalorder %s116, %s119
      %p125 = scmp.eq.s32.totalorder %s28, 0
      %p126 = por %p124, %p125
      %p127 = scmp.ne.s32.totalorder %s116, %s119
      %p128 = scmp.eq.s32.totalorder %s33, 1
      %p129 = por %p127, %p128
      %p130 = scmp.ne.s32.totalorder %s119, %s120
      %p131 = scmp.eq.s32.totalorder %s33, 0
      %p132 = por %p130, %p131
      %p133 = scmp.ne.s32.totalorder %s119, %s120
      %p134 = scmp.eq.s32.totalorder %s34, 1
      %p135 = por %p133, %p134
      %p137 = scmp.ne.s32.totalorder %s120, %s136
      %p138 = scmp.eq.s32.totalorder %s34, 0
      %p139 = por %p137, %p138
      %s140 = ssub.s32 %s28, %s35
      %p141 = scmp.eq.s32.totalorder %s140, 0
      %s143 = sadd.s32 %s142, 1
      %s144 = scalar_select %p141, %s142, %s143
      %p147 = pneg %p141
      %p148 = scmp.eq.s32.totalorder %s28, 1
      %p149 = por %p147, %p148
      %p150 = scmp.ne.s32.totalorder %s142, %s145
      %p151 = scmp.eq.s32.totalorder %s28, 0
      %p152 = por %p150, %p151
      %p153 = scmp.ne.s32.totalorder %s142, %s145
      %p154 = scmp.eq.s32.totalorder %s33, 1
      %p155 = por %p153, %p154
      %p156 = scmp.ne.s32.totalorder %s145, %s146
      %p157 = scmp.eq.s32.totalorder %s33, 0
      %p158 = por %p156, %p157
      %p159 = scmp.ne.s32.totalorder %s145, %s146
      %p160 = scmp.eq.s32.totalorder %s34, 1
      %p161 = por %p159, %p160
      %p163 = scmp.ne.s32.totalorder %s146, %s162
      %p164 = scmp.eq.s32.totalorder %s34, 0
      %p165 = por %p163, %p164
      %s166 = ssub.s32 %s28, %s35
      %p167 = scmp.eq.s32.totalorder %s166, 0
      %s169 = sadd.s32 %s168, 1
      %s170 = scalar_select %p167, %s168, %s169
      %p173 = pneg %p167
      %p174 = scmp.eq.s32.totalorder %s28, 1
      %p175 = por %p173, %p174
      %p176 = scmp.ne.s32.totalorder %s168, %s171
      %p177 = scmp.eq.s32.totalorder %s28, 0
      %p178 = por %p176, %p177
      %p179 = scmp.ne.s32.totalorder %s168, %s171
      %p180 = scmp.eq.s32.totalorder %s33, 1
      %p181 = por %p179, %p180
      %p182 = scmp.ne.s32.totalorder %s171, %s172
      %p183 = scmp.eq.s32.totalorder %s33, 0
      %p184 = por %p182, %p183
      %p185 = scmp.ne.s32.totalorder %s171, %s172
      %p186 = scmp.eq.s32.totalorder %s34, 1
      %p187 = por %p185, %p186
      %p189 = scmp.ne.s32.totalorder %s172, %s188
      %p190 = scmp.eq.s32.totalorder %s34, 0
      %p191 = por %p189, %p190
      %p192 = scmp.le.s32.totalorder 1, %s28
      %p193 = scmp.lt.s32.totalorder %s28, 3
      %p194 = pnand %p192, %p193
      %p195 = pneg %p194
      // Predicated region
      $region9: #{tpu_custom_call.1} parent=5 // pred_check
        _
      $region10: #{tpu_custom_call.1} parent=5 // pred_check_branch
        %197 = sbr.rel (%p194) target = $region12
      $region11: #{tpu_custom_call.1} parent=5 // pred_region
        %s198 = ssub.s32 %s28, 1
      $region12: #{tpu_custom_call.1} parent=5 // pred_fallthru
        _
      %p199 = scmp.lt.s32.totalorder %s28, 2
      // Predicated region
      $region13: #{tpu_custom_call.1} parent=5 // pred_check
        %p200 = pneg %p199
      $region14: #{tpu_custom_call.1} parent=5 // pred_check_branch
        %202 = sbr.rel (%p200) target = $region16
      $region15: #{tpu_custom_call.1} parent=5 // pred_region
        // Predicated region
        $region17: #{tpu_custom_call.1} parent=15 // pred_check
          %p203 = pneg %p48
        $region18: #{tpu_custom_call.1} parent=15 // pred_check_branch
          %205 = sbr.rel (%p203) target = $region20
        $region19: #{tpu_custom_call.1} parent=15 // pred_region
          %p206 = scmp.lt.s32.totalorder %s28, 1
          %s207 = scalar_select %p206, %s28, 1
          %s208 = smul.addr %s207, 8
          %s209 = smul.addr %s208, 8
          %s210 = scalar_lea.vmem %s2, %s209
        $region20: #{tpu_custom_call.1} parent=15 // pred_fallthru
          _
        // Predicated region
        $region21: #{tpu_custom_call.1} parent=15 // pred_check
          %p211 = pneg %p74
        $region22: #{tpu_custom_call.1} parent=15 // pred_check_branch
          %213 = sbr.rel (%p211) target = $region24
        $region23: #{tpu_custom_call.1} parent=15 // pred_region
          %p214 = scmp.lt.s32.totalorder %s28, 1
          %s215 = scalar_select %p214, %s28, 1
          %s216 = scalar_lea.vmem %s3, %s215
        $region24: #{tpu_custom_call.1} parent=15 // pred_fallthru
          _
        // Predicated region
        $region25: #{tpu_custom_call.1} parent=15 // pred_check
          %p217 = pneg %p100
        $region26: #{tpu_custom_call.1} parent=15 // pred_check_branch
          %219 = sbr.rel (%p217) target = $region28
        $region27: #{tpu_custom_call.1} parent=15 // pred_region
          %p220 = scmp.lt.s32.totalorder %s28, 1
          %s221 = scalar_select %p220, %s28, 1
          %s222 = smul.addr %s221, 4
          %s223 = scalar_lea.vmem %s4, %s222
        $region28: #{tpu_custom_call.1} parent=15 // pred_fallthru
          _
        // Predicated region
        $region29: #{tpu_custom_call.1} parent=15 // pred_check
          %p224 = pneg %p126
        $region30: #{tpu_custom_call.1} parent=15 // pred_check_branch
          %226 = sbr.rel (%p224) target = $region32
        $region31: #{tpu_custom_call.1} parent=15 // pred_region
          %p227 = scmp.lt.s32.totalorder %s28, 1
          %s228 = scalar_select %p227, %s28, 1
          %s229 = smul.addr %s228, 4
          %s230 = scalar_lea.vmem %s5, %s229
        $region32: #{tpu_custom_call.1} parent=15 // pred_fallthru
          _
      $region16: #{tpu_custom_call.1} parent=5 // pred_fallthru
        _
      %p231 = scmp.le.s32.totalorder 1, %s28
      %p232 = scmp.lt.s32.totalorder %s28, 3
      %p233 = pnand %p231, %p232
      %p234 = pneg %p233
      // Predicated region
      $region33: #{tpu_custom_call.1} parent=5 // pred_check
        _
      $region34: #{tpu_custom_call.1} parent=5 // pred_check_branch
        %236 = sbr.rel (%p233) target = $region36
      $region35: #{tpu_custom_call.1} parent=5 // pred_region
        %s237 = ssub.s32 %s28, 1
        %p238 = scmp.lt.s32.totalorder %s33, 1
        %s239 = scalar_select %p238, %s33, 1
        %s240 = smul.addr %s239, 8
        %s241 = smul.addr %s240, 8
        %s242 = scalar_lea.vmem %s2, %s241
        %p243 = pneg %p54
        %p244 = pneg %p51
        %p245 = scmp.lt.s32.totalorder %s33, 1
        %s246 = scalar_select %p245, %s33, 1
        %s247 = scalar_lea.vmem %s3, %s246
        %p248 = pneg %p80
        %p249 = pneg %p77
        %p250 = scmp.lt.s32.totalorder %s33, 1
        %s251 = scalar_select %p250, %s33, 1
        %s252 = smul.addr %s251, 4
        %s253 = scalar_lea.vmem %s4, %s252
        %p254 = pneg %p106
        %p255 = pneg %p103
        %p256 = scmp.lt.s32.totalorder %s33, 1
        %s257 = scalar_select %p256, %s33, 1
        %s258 = smul.addr %s257, 4
        %s259 = scalar_lea.vmem %s5, %s258
        %p260 = pneg %p132
        %p261 = pneg %p129
        %p262 = pneg %p158
        %p263 = pneg %p155
        %s264 = sand.u32 %s145, 1
        %s265 = scalar_lea.sflag [#allocation8], %s264
        %s266 = sand.u32 %s145, 1
        %s267 = smul.addr %s266, 4
        %s268 = scalar_lea.vmem [#allocation7], %s267
        %p269 = pneg %p184
        %p270 = pneg %p181
        %s271 = sand.u32 %s171, 1
        %s272 = scalar_lea.sflag [#allocation10], %s271
        %s273 = sand.u32 %s171, 1
        %s274 = smul.addr %s273, 4
        %s275 = scalar_lea.vmem [#allocation9], %s274
        %p276 = scmp.lt.s32.totalorder %s33, 1
        %s277 = scalar_select %p276, %s33, 1
        %s278 = smul.addr %s277, 8
        %s279 = smul.addr %s278, 8
        %s280 = scalar_lea.vmem %s2, %s279
        %p281 = scmp.lt.s32.totalorder %s33, 1
        %s282 = scalar_select %p281, %s33, 1
        %s283 = scalar_lea.vmem %s3, %s282
        %p284 = scmp.lt.s32.totalorder %s33, 1
        %s285 = scalar_select %p284, %s33, 1
        %s286 = smul.addr %s285, 4
        %s287 = scalar_lea.vmem %s4, %s286
        %p288 = scmp.lt.s32.totalorder %s33, 1
        %s289 = scalar_select %p288, %s33, 1
        %s290 = smul.addr %s289, 4
        %s291 = scalar_lea.vmem %s5, %s290
        %p292 = scmp.eq.s32.totalorder %s33, 0
        // Predicated region
        $region37: #{tpu_custom_call.1} parent=35 // pred_check
          %p293 = pneg %p292
        $region38: #{tpu_custom_call.1} parent=35 // pred_check_branch
          %295 = sbr.rel (%p293) target = $region40
        $region39: #{tpu_custom_call.1} parent=35 // pred_region
          %s296 = sld [smem:[#allocation6]]
          %s297 = scalar_lea.vmem %s1, %s296
          // Predicated region
          $region41: #{tpu_custom_call.1} parent=39 // pred_check
            _
          $region42: #{tpu_custom_call.1} parent=39 // pred_check_branch
            %299 = sbr.rel target = $region44
          $region43: #{tpu_custom_call.1} parent=39 // pred_region
            // Predicated region
            $region56: #{tpu_custom_call.1} parent=43 // pred_check
              _
            $region57: #{tpu_custom_call.1} parent=43 // pred_check_branch
              %315 = sbr.rel (0) target = $region59
            $region58: #{tpu_custom_call.1} parent=43 // pred_region
              %s317 = ssub.s32 2, 1
              loop: start=0, step=1, limit=1
              $region60: #{tpu_custom_call.1} parent=58 // loop_pre_header
                _
              $region61: #{tpu_custom_call.1} parent=58 // loop_header
                %s319 = sphi 0, %s323
                %p320 = scmp.ge.s32.totalorder %s319, 1
                %s324 = sphi %s297, %s297
                %s325 = sphi [#allocation2], [#allocation2]
              $region62: #{tpu_custom_call.1} parent=58 // loop_header_branch
                %322 = sbr.rel (%p320) target = $region66
              $region63: #{tpu_custom_call.1} parent=58 // loop_body
                %v326 = vld [vmem:[%s324] sm:%s317]
                %327 = vst [vmem:[%s325] sm:%s317] %v326
              $region64: #{tpu_custom_call.1} parent=58 // loop_footer
                %s323 = sadd.s32 1, %s319
              $region65: #{tpu_custom_call.1} parent=58 // loop_footer_branch
                %318 = sbr.rel target = $region61
              $region66: #{tpu_custom_call.1} parent=58 // loop_exit
                _
            $region59: #{tpu_custom_call.1} parent=43 // pred_fallthru
              _
          $region44: #{tpu_custom_call.1} parent=39 // pred_fallthru
            _
          // Predicated region
          $region45: #{tpu_custom_call.1} parent=39 // pred_check
            _
          $region46: #{tpu_custom_call.1} parent=39 // pred_check_branch
            %301 = sbr.rel (0) target = $region48
          $region47: #{tpu_custom_call.1} parent=39 // pred_region
            %s303 = ssub.s32 2, 1
            loop: start=0, step=1, limit=1
            $region49: #{tpu_custom_call.1} parent=47 // loop_pre_header
              _
            $region50: #{tpu_custom_call.1} parent=47 // loop_header
              %s305 = sphi 0, %s309
              %p306 = scmp.ge.s32.totalorder %s305, 1
              %s310 = sphi %s297, %s297
              %s311 = sphi [#allocation2], [#allocation2]
            $region51: #{tpu_custom_call.1} parent=47 // loop_header_branch
              %308 = sbr.rel (%p306) target = $region55
            $region52: #{tpu_custom_call.1} parent=47 // loop_body
              %v312 = vld [vmem:[%s310] sm:%s303]
              %313 = vst [vmem:[%s311] sm:%s303] %v312
            $region53: #{tpu_custom_call.1} parent=47 // loop_footer
              %s309 = sadd.s32 1, %s305
            $region54: #{tpu_custom_call.1} parent=47 // loop_footer_branch
              %304 = sbr.rel target = $region50
            $region55: #{tpu_custom_call.1} parent=47 // loop_exit
              _
          $region48: #{tpu_custom_call.1} parent=39 // pred_fallthru
            _
          // Predicated region
          $region67: #{tpu_custom_call.1} parent=39 // pred_check
            _
          $region68: #{tpu_custom_call.1} parent=39 // pred_check_branch
            %330 = sbr.rel (0) target = $region70
          $region69: #{tpu_custom_call.1} parent=39 // pred_region
            %331 = vsyncadd [#allocation4], 16
          $region70: #{tpu_custom_call.1} parent=39 // pred_fallthru
            _
          %s332 = sld [smem:[#allocation6 + $0x1]]
          %s333 = scalar_lea.vmem %s1, %s332
          %s334 = scalar_lea.vmem [#allocation2], 1
          %s335 = scalar_lea.sflag [#allocation4], 1
          // Predicated region
          $region71: #{tpu_custom_call.1} parent=39 // pred_check
            _
          $region72: #{tpu_custom_call.1} parent=39 // pred_check_branch
            %337 = sbr.rel target = $region74
          $region73: #{tpu_custom_call.1} parent=39 // pred_region
            // Predicated region
            $region86: #{tpu_custom_call.1} parent=73 // pred_check
              _
            $region87: #{tpu_custom_call.1} parent=73 // pred_check_branch
              %353 = sbr.rel (0) target = $region89
            $region88: #{tpu_custom_call.1} parent=73 // pred_region
              %s355 = ssub.s32 2, 1
              loop: start=0, step=1, limit=1
              $region90: #{tpu_custom_call.1} parent=88 // loop_pre_header
                _
              $region91: #{tpu_custom_call.1} parent=88 // loop_header
                %s357 = sphi 0, %s361
                %p358 = scmp.ge.s32.totalorder %s357, 1
                %s362 = sphi %s333, %s333
                %s363 = sphi %s334, %s334
              $region92: #{tpu_custom_call.1} parent=88 // loop_header_branch
                %360 = sbr.rel (%p358) target = $region96
              $region93: #{tpu_custom_call.1} parent=88 // loop_body
                %v364 = vld [vmem:[%s362] sm:%s355]
                %365 = vst [vmem:[%s363] sm:%s355] %v364
              $region94: #{tpu_custom_call.1} parent=88 // loop_footer
                %s361 = sadd.s32 1, %s357
              $region95: #{tpu_custom_call.1} parent=88 // loop_footer_branch
                %356 = sbr.rel target = $region91
              $region96: #{tpu_custom_call.1} parent=88 // loop_exit
                _
            $region89: #{tpu_custom_call.1} parent=73 // pred_fallthru
              _
          $region74: #{tpu_custom_call.1} parent=39 // pred_fallthru
            _
          // Predicated region
          $region75: #{tpu_custom_call.1} parent=39 // pred_check
            _
          $region76: #{tpu_custom_call.1} parent=39 // pred_check_branch
            %339 = sbr.rel (0) target = $region78
          $region77: #{tpu_custom_call.1} parent=39 // pred_region
            %s341 = ssub.s32 2, 1
            loop: start=0, step=1, limit=1
            $region79: #{tpu_custom_call.1} parent=77 // loop_pre_header
              _
            $region80: #{tpu_custom_call.1} parent=77 // loop_header
              %s343 = sphi 0, %s347
              %p344 = scmp.ge.s32.totalorder %s343, 1
              %s348 = sphi %s333, %s333
              %s349 = sphi %s334, %s334
            $region81: #{tpu_custom_call.1} parent=77 // loop_header_branch
              %346 = sbr.rel (%p344) target = $region85
            $region82: #{tpu_custom_call.1} parent=77 // loop_body
              %v350 = vld [vmem:[%s348] sm:%s341]
              %351 = vst [vmem:[%s349] sm:%s341] %v350
            $region83: #{tpu_custom_call.1} parent=77 // loop_footer
              %s347 = sadd.s32 1, %s343
            $region84: #{tpu_custom_call.1} parent=77 // loop_footer_branch
              %342 = sbr.rel target = $region80
            $region85: #{tpu_custom_call.1} parent=77 // loop_exit
              _
          $region78: #{tpu_custom_call.1} parent=39 // pred_fallthru
            _
          // Predicated region
          $region97: #{tpu_custom_call.1} parent=39 // pred_check
            _
          $region98: #{tpu_custom_call.1} parent=39 // pred_check_branch
            %368 = sbr.rel (0) target = $region100
          $region99: #{tpu_custom_call.1} parent=39 // pred_region
            %369 = vsyncadd %s335, 16
          $region100: #{tpu_custom_call.1} parent=39 // pred_fallthru
            _
          %s370 = sld [smem:[#allocation6 + $0x2]]
          %s371 = scalar_lea.vmem %s1, %s370
          %s372 = scalar_lea.vmem [#allocation2], 2
          %s373 = scalar_lea.sflag [#allocation4], 2
          // Predicated region
          $region101: #{tpu_custom_call.1} parent=39 // pred_check
            _
          $region102: #{tpu_custom_call.1} parent=39 // pred_check_branch
            %375 = sbr.rel target = $region104
          $region103: #{tpu_custom_call.1} parent=39 // pred_region
            // Predicated region
            $region116: #{tpu_custom_call.1} parent=103 // pred_check
              _
            $region117: #{tpu_custom_call.1} parent=103 // pred_check_branch
              %391 = sbr.rel (0) target = $region119
            $region118: #{tpu_custom_call.1} parent=103 // pred_region
              %s393 = ssub.s32 2, 1
              loop: start=0, step=1, limit=1
              $region120: #{tpu_custom_call.1} parent=118 // loop_pre_header
                _
              $region121: #{tpu_custom_call.1} parent=118 // loop_header
                %s395 = sphi 0, %s399
                %p396 = scmp.ge.s32.totalorder %s395, 1
                %s400 = sphi %s371, %s371
                %s401 = sphi %s372, %s372
              $region122: #{tpu_custom_call.1} parent=118 // loop_header_branch
                %398 = sbr.rel (%p396) target = $region126
              $region123: #{tpu_custom_call.1} parent=118 // loop_body
                %v402 = vld [vmem:[%s400] sm:%s393]
                %403 = vst [vmem:[%s401] sm:%s393] %v402
              $region124: #{tpu_custom_call.1} parent=118 // loop_footer
                %s399 = sadd.s32 1, %s395
              $region125: #{tpu_custom_call.1} parent=118 // loop_footer_branch
                %394 = sbr.rel target = $region121
              $region126: #{tpu_custom_call.1} parent=118 // loop_exit
                _
            $region119: #{tpu_custom_call.1} parent=103 // pred_fallthru
              _
          $region104: #{tpu_custom_call.1} parent=39 // pred_fallthru
            _
          // Predicated region
          $region105: #{tpu_custom_call.1} parent=39 // pred_check
            _
          $region106: #{tpu_custom_call.1} parent=39 // pred_check_branch
            %377 = sbr.rel (0) target = $region108
          $region107: #{tpu_custom_call.1} parent=39 // pred_region
            %s379 = ssub.s32 2, 1
            loop: start=0, step=1, limit=1
            $region109: #{tpu_custom_call.1} parent=107 // loop_pre_header
              _
            $region110: #{tpu_custom_call.1} parent=107 // loop_header
              %s381 = sphi 0, %s385
              %p382 = scmp.ge.s32.totalorder %s381, 1
              %s386 = sphi %s371, %s371
              %s387 = sphi %s372, %s372
            $region111: #{tpu_custom_call.1} parent=107 // loop_header_branch
              %384 = sbr.rel (%p382) target = $region115
            $region112: #{tpu_custom_call.1} parent=107 // loop_body
              %v388 = vld [vmem:[%s386] sm:%s379]
              %389 = vst [vmem:[%s387] sm:%s379] %v388
            $region113: #{tpu_custom_call.1} parent=107 // loop_footer
              %s385 = sadd.s32 1, %s381
            $region114: #{tpu_custom_call.1} parent=107 // loop_footer_branch
              %380 = sbr.rel target = $region110
            $region115: #{tpu_custom_call.1} parent=107 // loop_exit
              _
          $region108: #{tpu_custom_call.1} parent=39 // pred_fallthru
            _
          // Predicated region
          $region127: #{tpu_custom_call.1} parent=39 // pred_check
            _
          $region128: #{tpu_custom_call.1} parent=39 // pred_check_branch
            %406 = sbr.rel (0) target = $region130
          $region129: #{tpu_custom_call.1} parent=39 // pred_region
            %407 = vsyncadd %s373, 16
          $region130: #{tpu_custom_call.1} parent=39 // pred_fallthru
            _
          %s408 = sld [smem:[#allocation6 + $0x3]]
          %s409 = scalar_lea.vmem %s1, %s408
          %s410 = scalar_lea.vmem [#allocation2], 3
          %s411 = scalar_lea.sflag [#allocation4], 3
          // Predicated region
          $region131: #{tpu_custom_call.1} parent=39 // pred_check
            _
          $region132: #{tpu_custom_call.1} parent=39 // pred_check_branch
            %413 = sbr.rel target = $region134
          $region133: #{tpu_custom_call.1} parent=39 // pred_region
            // Predicated region
            $region146: #{tpu_custom_call.1} parent=133 // pred_check
              _
            $region147: #{tpu_custom_call.1} parent=133 // pred_check_branch
              %429 = sbr.rel (0) target = $region149
            $region148: #{tpu_custom_call.1} parent=133 // pred_region
              %s431 = ssub.s32 2, 1
              loop: start=0, step=1, limit=1
              $region150: #{tpu_custom_call.1} parent=148 // loop_pre_header
                _
              $region151: #{tpu_custom_call.1} parent=148 // loop_header
                %s433 = sphi 0, %s437
                %p434 = scmp.ge.s32.totalorder %s433, 1
                %s438 = sphi %s409, %s409
                %s439 = sphi %s410, %s410
              $region152: #{tpu_custom_call.1} parent=148 // loop_header_branch
                %436 = sbr.rel (%p434) target = $region156
              $region153: #{tpu_custom_call.1} parent=148 // loop_body
                %v440 = vld [vmem:[%s438] sm:%s431]
                %441 = vst [vmem:[%s439] sm:%s431] %v440
              $region154: #{tpu_custom_call.1} parent=148 // loop_footer
                %s437 = sadd.s32 1, %s433
              $region155: #{tpu_custom_call.1} parent=148 // loop_footer_branch
                %432 = sbr.rel target = $region151
              $region156: #{tpu_custom_call.1} parent=148 // loop_exit
                _
            $region149: #{tpu_custom_call.1} parent=133 // pred_fallthru
              _
          $region134: #{tpu_custom_call.1} parent=39 // pred_fallthru
            _
          // Predicated region
          $region135: #{tpu_custom_call.1} parent=39 // pred_check
            _
          $region136: #{tpu_custom_call.1} parent=39 // pred_check_branch
            %415 = sbr.rel (0) target = $region138
          $region137: #{tpu_custom_call.1} parent=39 // pred_region
            %s417 = ssub.s32 2, 1
            loop: start=0, step=1, limit=1
            $region139: #{tpu_custom_call.1} parent=137 // loop_pre_header
              _
            $region140: #{tpu_custom_call.1} parent=137 // loop_header
              %s419 = sphi 0, %s423
              %p420 = scmp.ge.s32.totalorder %s419, 1
              %s424 = sphi %s409, %s409
              %s425 = sphi %s410, %s410
            $region141: #{tpu_custom_call.1} parent=137 // loop_header_branch
              %422 = sbr.rel (%p420) target = $region145
            $region142: #{tpu_custom_call.1} parent=137 // loop_body
              %v426 = vld [vmem:[%s424] sm:%s417]
              %427 = vst [vmem:[%s425] sm:%s417] %v426
            $region143: #{tpu_custom_call.1} parent=137 // loop_footer
              %s423 = sadd.s32 1, %s419
            $region144: #{tpu_custom_call.1} parent=137 // loop_footer_branch
              %418 = sbr.rel target = $region140
            $region145: #{tpu_custom_call.1} parent=137 // loop_exit
              _
          $region138: #{tpu_custom_call.1} parent=39 // pred_fallthru
            _
          // Predicated region
          $region157: #{tpu_custom_call.1} parent=39 // pred_check
            _
          $region158: #{tpu_custom_call.1} parent=39 // pred_check_branch
            %444 = sbr.rel (0) target = $region160
          $region159: #{tpu_custom_call.1} parent=39 // pred_region
            %445 = vsyncadd %s411, 16
          $region160: #{tpu_custom_call.1} parent=39 // pred_fallthru
            _
          %s446 = sld [smem:[#allocation6]]
          %s447 = smul.u32 1, 1
          %s448 = sshll.u32 %s447, 4
          %449 = dma.done [#allocation4], %s448
          %s450 = sld [smem:[#allocation6 + $0x1]]
          %s451 = sshll.u32 %s447, 4
          %452 = dma.done %s335, %s451
          %s453 = sld [smem:[#allocation6 + $0x2]]
          %s454 = sshll.u32 %s447, 4
          %455 = dma.done %s373, %s454
          %s456 = sld [smem:[#allocation6 + $0x3]]
          %s457 = sshll.u32 %s447, 4
          %458 = dma.done %s411, %s457
          %v459 = vld [vmem:[#allocation2] sm:$0xf]
          %vm460 = vcmask 125952
          %461 = vst.msk [vmem:[#allocation3] sm:$0xf] %vm460, %v459
          %vm462 = vcmask 257152
          %463 = vst.msk [vmem:[#allocation3] sm:$0xf] %vm462, 0.0
        $region40: #{tpu_custom_call.1} parent=35 // pred_fallthru
          _
        %v464 = vld [vmem:[%s287] sm:$0xf]
        %466 = vrot.lane.b32.xlu0 %v464, 32
        %v467 = vpop.permute.xlu0 %466
        %vm469 = vcmask 519424
        %470 = vst.msk [vmem:[#allocation3] sm:$0xf] %vm469, %v467
        %v471 = vld [vmem:[#allocation3] sm:$0xf]
        %v472 = vld [vmem:[%s280] sm:$0xff]
        %v473 = vld [vmem:[%s280 + $0x8] sm:$0xff]
        %v474 = vld [vmem:[%s280 + $0x10] sm:$0xff]
        %v475 = vld [vmem:[%s280 + $0x18] sm:$0xff]
        %v476 = vld [vmem:[%s280 + $0x20] sm:$0xff]
        %v477 = vld [vmem:[%s280 + $0x28] sm:$0xff]
        %v478 = vld [vmem:[%s280 + $0x30] sm:$0xff]
        %v479 = vld [vmem:[%s280 + $0x38] sm:$0xff]
        %v480 = vld [vmem:[%s283] sm:$0x1]
        %v482 = vperm.slane %v480, 0
        %vm484 = vcmask 523264
        %v486 = vsel %vm484, %v471, 0
        %488 = vmatpush.msra.mxu0 0.0
        %489 = vmatpush.msra.mxu0 0.0
        %490 = vmatpush.msra.mxu0 0.0
        %491 = vmatpush.msra.mxu0 0.0
        %492 = vmatpush.msra.mxu0 0.0
        %493 = vmatpush.msra.mxu0 0.0
        %494 = vmatpush.msra.mxu0 0.0
        %495 = vmatpush.msra.mxu0 0.0
        %496 = vmatpush.msra.mxu0 %v479
        %497 = vmatpush.msra.mxu0 %v478
        %498 = vmatpush.msra.mxu0 %v477
        %499 = vmatpush.msra.mxu0 %v476
        %500 = vmatpush.msra.mxu0 %v475
        %501 = vmatpush.msra.mxu0 %v474
        %502 = vmatpush.msra.mxu0 %v473
        %503 = vmatpush.msra.mxu0 %v472
        %504 = vmatmul.f32.gmra.mxu0 %v486
        %v505 = vpop.f32.mrf.mxu0
        %v506 = vadd.f32 %v482, %v505
        %507 = vdwg.mxu0
        %v508 = vxor.u32 %v506, 2147483648
        %v509 = vmul.f32 %v508, 1.442695
        %v510 = vpow.pop %v509
        %v511 = vadd.f32 %v510, 1.0
        %v512 = vrcp.pop %v511
        %v513 = vmul.f32 %v511, %v512
        %v514 = vsub.f32 1.0, %v513
        %v515 = vmul.f32 %v512, %v514
        %v516 = vadd.f32 %v512, %v515
        %vm517 = vweird.f32 %v511
        %vm518 = vweird.f32 %v512
        %vm519 = vmor %vm517, %vm518
        %v520 = vsel %vm519, %v512, %v516
        %v521 = vand.u32 2147483647, %v511
        %vm522 = vcmp.eq.f32.partialorder %v521, 8.507059e+37
        %v523 = vand.u32 %v511, 2147483648
        %v524 = vor.u32 1.1754944e-38, %v523
        %v525 = vsel %vm522, %v524, %v520
        %v526 = vmul.f32 1.0, %v525
        %v527 = vtanh.pop %v506
        %v528 = vld [vmem:[%s291] sm:$0xf]
        %530 = vrot.lane.b32.xlu0 %v528, 32
        %v531 = vpop.permute.xlu0 %530
        %v533 = vmul.f32 %v526, %v531
        %535 = vrot.lane.b32.xlu0 %v527, 64
        %v536 = vpop.permute.xlu0 %535
        %v538 = vmul.f32 %v526, %v536
        %540 = vrot.lane.b32.xlu0 %v538, 32
        %v541 = vpop.permute.xlu0 %540
        %v543 = vadd.f32 %v533, %v541
        %v544 = vtanh.pop %v543
        %546 = vrot.lane.b32.xlu0 %v544, 64
        %v547 = vpop.permute.xlu0 %546
        %v549 = vmul.f32 %v526, %v547
        %551 = vrot.lane.b32.xlu0 %v549, 32
        %v552 = vpop.permute.xlu0 %551
        %vm554 = vcmask 257024
        %555 = vst.msk [vmem:[%s268] sm:$0xf] %vm554, %v552
        %557 = vrot.lane.b32.xlu0 %v543, 96
        %v558 = vpop.permute.xlu0 %557
        %560 = vst.msk [vmem:[%s275] sm:$0xf] %vm554, %v558
        %561 = vst.msk [vmem:[#allocation3] sm:$0xf] %vm554, %v552
        %s562 = sand.u32 %s145, 1
        %s563 = scalar_lea.sflag [#allocation8], %s562
        %s564 = sand.u32 %s145, 1
        %s565 = smul.addr %s564, 4
        %s566 = scalar_lea.vmem [#allocation7], %s565
        %s567 = sand.u32 %s171, 1
        %s568 = scalar_lea.sflag [#allocation10], %s567
        %s569 = sand.u32 %s171, 1
        %s570 = smul.addr %s569, 4
        %s571 = scalar_lea.vmem [#allocation9], %s570
        // Predicated region
        $region161: #{tpu_custom_call.1} parent=35 // pred_check
          %p572 = pneg %p155
        $region162: #{tpu_custom_call.1} parent=35 // pred_check_branch
          %574 = sbr.rel (%p572) target = $region164
        $region163: #{tpu_custom_call.1} parent=35 // pred_region
          %576 = vsyncadd %s563, 0
          %s577 = smul.addr %s33, 4
          %s578 = scalar_lea.hbm %s6, %s577
          %s580 = sshll.u32 %s566, 4
          %s581 = int_to_ptr.vmem [resolvable:$true] %s580
          %s582 = sshll.u32 %s578, 4
          %s583 = int_to_ptr.hbm [resolvable:$true] %s582
          %585 = dma.vmem_to_hbm [thread:$0]  %s581, 64, %s583, %s563
        $region164: #{tpu_custom_call.1} parent=35 // pred_fallthru
          _
        // Predicated region
        $region165: #{tpu_custom_call.1} parent=35 // pred_check
          %p586 = pneg %p181
        $region166: #{tpu_custom_call.1} parent=35 // pred_check_branch
          %588 = sbr.rel (%p586) target = $region168
        $region167: #{tpu_custom_call.1} parent=35 // pred_region
          %590 = vsyncadd %s568, 0
          %s591 = smul.addr %s33, 4
          %s592 = scalar_lea.hbm %s7, %s591
          %s594 = sshll.u32 %s571, 4
          %s595 = int_to_ptr.vmem [resolvable:$true] %s594
          %s596 = sshll.u32 %s592, 4
          %s597 = int_to_ptr.hbm [resolvable:$true] %s596
          %599 = dma.vmem_to_hbm [thread:$0]  %s595, 64, %s597, %s568
        $region168: #{tpu_custom_call.1} parent=35 // pred_fallthru
          _
      $region36: #{tpu_custom_call.1} parent=5 // pred_fallthru
        _
      %p600 = scmp.le.s32.totalorder 2, %s28
      // Predicated region
      $region169: #{tpu_custom_call.1} parent=5 // pred_check
        %p601 = pneg %p600
      $region170: #{tpu_custom_call.1} parent=5 // pred_check_branch
        %603 = sbr.rel (%p601) target = $region172
      $region171: #{tpu_custom_call.1} parent=5 // pred_region
        %s604 = ssub.s32 %s28, 2
        // Predicated region
        $region173: #{tpu_custom_call.1} parent=171 // pred_check
          %p605 = pneg %p161
        $region174: #{tpu_custom_call.1} parent=171 // pred_check_branch
          %607 = sbr.rel (%p605) target = $region176
        $region175: #{tpu_custom_call.1} parent=171 // pred_region
          %s608 = sand.u32 %s146, 1
          %s609 = scalar_lea.sflag [#allocation8], %s608
          %s610 = sand.u32 %s146, 1
          %s611 = smul.addr %s610, 4
          %s612 = scalar_lea.vmem [#allocation7], %s611
          %614 = dma.done %s609, 64
        $region176: #{tpu_custom_call.1} parent=171 // pred_fallthru
          _
        // Predicated region
        $region177: #{tpu_custom_call.1} parent=171 // pred_check
          %p615 = pneg %p187
        $region178: #{tpu_custom_call.1} parent=171 // pred_check_branch
          %617 = sbr.rel (%p615) target = $region180
        $region179: #{tpu_custom_call.1} parent=171 // pred_region
          %s618 = sand.u32 %s172, 1
          %s619 = scalar_lea.sflag [#allocation10], %s618
          %s620 = sand.u32 %s172, 1
          %s621 = smul.addr %s620, 4
          %s622 = scalar_lea.vmem [#allocation9], %s621
          %624 = dma.done %s619, 64
        $region180: #{tpu_custom_call.1} parent=171 // pred_fallthru
          _
      $region172: #{tpu_custom_call.1} parent=5 // pred_fallthru
        _
    $region6: #{tpu_custom_call.1} parent=1 // loop_footer
      %s32 = sadd.s32 1, %s28
    $region7: #{tpu_custom_call.1} parent=1 // loop_footer_branch
      %27 = sbr.rel target = $region3
    $region8: #{tpu_custom_call.1} parent=1 // loop_exit
      _
    %625 = vsyncpa [#allocation8], 1
    %s626 = scalar_lea.sflag [#allocation8], 1
    %627 = vsyncpa %s626, 1
    %628 = vsyncpa [#allocation10], 1
    %s629 = scalar_lea.sflag [#allocation10], 1
    %630 = vsyncpa %s629, 1
  %631 = vsyncmov [#allocation4]
  %s632 = vpop.sfrf %631
  %p633 = scmp.eq.s32.totalorder %s632, 0
  %p634 = pneg %p633
  %636 = shalt.err (%p634)
  %s637 = scalar_lea.sflag [#allocation4], 1
  %638 = vsyncmov %s637
  %s639 = vpop.sfrf %638
  %p640 = scmp.eq.s32.totalorder %s639, 0
  %p641 = pneg %p640
  %643 = shalt.err (%p641)
  %s644 = scalar_lea.sflag [#allocation4], 2
  %645 = vsyncmov %s644
  %s646 = vpop.sfrf %645
  %p647 = scmp.eq.s32.totalorder %s646, 0
  %p648 = pneg %p647
  %650 = shalt.err (%p648)
  %s651 = scalar_lea.sflag [#allocation4], 3
  %652 = vsyncmov %s651
  %s653 = vpop.sfrf %652
  %p654 = scmp.eq.s32.totalorder %s653, 0
  %p655 = pneg %p654
  %657 = shalt.err (%p655)

</llo_original>
